<compile_context>
chip_gen: v7x
topology: tpu7x:2x2x1
jax: 0.10.0
libtpu: 0.0.40
codegen_flags: <defaults>
</compile_context>

<pallas_src>
import jax
import jax.numpy as jnp
from jax.experimental import pallas as pl
from jax.experimental.pallas import tpu as pltpu


def _fbn_kernel(x_ref, scale_ref, bias_ref, o_ref):
    # x: (tm, tn); scale/bias: (tm, 1) or (1, tn) -> cheap VPU broadcast FMA.
    o_ref[...] = (x_ref[...] * scale_ref[...] + bias_ref[...]).astype(o_ref.dtype)


def _vmem_capacity_bytes():
    try:
        info = pltpu.get_tpu_info()
        cap = getattr(info, "vmem_capacity_bytes", None)
        if cap:
            return int(cap)
    except Exception:
        pass
    return 64 << 20  # conservative default (v7x per-TensorCore VMEM)


def _device_kind_lower():
    try:
        return jax.devices()[0].device_kind.lower()
    except Exception:
        return ""


def _is_v5e(kind):
    return ("v5e" in kind) or ("v5 lite" in kind) or ("v5lite" in kind)


def _default_target_block_bytes():
    # v5e (~0.8 TB/s): 2 MiB already amortizes per-step overhead to <10%.
    # v6e/v7x: ~4 MiB cuts the per-step tax well below 10% at 1.4-3.2 TB/s
    # while keeping 2*in + 2*out well under v7x's 64 MiB VMEM.
    if _is_v5e(_device_kind_lower()):
        return 2 << 20
    return 4 << 20


def _choose_tiles(M, L, bytes_el, sub, target_bytes):
    # Lane tile: split whenever a sub-row slab overshoots the target, whether
    # or not L is 128-divisible; Pallas masks only the ragged last j-block.
    if L > 128 and L * sub * bytes_el > target_bytes:
        tn = max(128, (target_bytes // (sub * bytes_el)) // 128 * 128)
        tn = min(tn, (L // 128) * 128)
    else:
        tn = L

    # Row tile: multiple of the dtype-native sublane packing (8/16/32), sized
    # for ~target_bytes payload, or the full row count when M is tiny.
    if M < sub:
        tm = M
    else:
        rows = max(sub, target_bytes // max(1, tn * bytes_el))
        tm = max(sub, min((rows // sub) * sub, (M // sub) * sub))

    # If everything fits in one block, halve the row tile so the 'parallel'
    # grid axis has >=2 blocks (v7x has 2 TensorCores sharing HBM BW).
    if pl.cdiv(M, tm) == 1 and pl.cdiv(L, tn) == 1 and M >= 2 * sub:
        tm = max(sub, ((tm // 2) // sub) * sub)

    return tm, tn


def frozen_batchnorm2d(x, weight, bias, running_mean, running_var,
                       eps=1e-5, target_block_bytes=None):
    """FrozenBatchNorm2d forward. x: (N, C, H, W). Params: (C,). Returns NCHW."""
    N, C, H, W = x.shape
    if target_block_bytes is None:
        target_block_bytes = _default_target_block_bytes()

    bytes_el = jnp.dtype(x.dtype).itemsize
    sub = max(8, 32 // max(1, bytes_el))  # native sublane mult: 8 f32, 16 bf16, 32 i8

    # Fold frozen stats into per-channel scale/bias in f32 (tiny (C,) math).
    scale_c = weight.astype(jnp.float32) * jax.lax.rsqrt(
        running_var.astype(jnp.float32) + eps)
    bias_c = bias.astype(jnp.float32) - running_mean.astype(jnp.float32) * scale_c

    # bf16 inputs on v6e/v7x: keep the FMA in bf16 (halves vreg traffic and
    # skips unpack/pack around the store).  v5e has no bf16 VPU -> keep f32.
    param_dtype = jnp.float32
    if x.dtype == jnp.bfloat16 and not _is_v5e(_device_kind_lower()):
        param_dtype = jnp.bfloat16

    if H * W < 512:
        # Small-spatial path: lanes = C*H*W so stores stay lane-dense even for
        # ResNet-tail shapes (e.g. 7x7); params become a (1, C*H*W) row that
        # broadcasts across sublanes.
        M, L = N, C * H * W
        x2 = x.reshape(M, L)                      # free reshape for NCHW
        scale_a = jnp.repeat(scale_c, H * W).reshape(1, L).astype(param_dtype)
        bias_a = jnp.repeat(bias_c, H * W).reshape(1, L).astype(param_dtype)
        tm, tn = _choose_tiles(M, L, bytes_el, sub, target_block_bytes)
        scale_spec = pl.BlockSpec((1, tn), lambda i, j: (0, j))
        bias_spec = pl.BlockSpec((1, tn), lambda i, j: (0, j))
    else:
        # General path: rows = (n, c), lanes = H*W (contiguous in NCHW so this
        # reshape is free); params become (N*C, 1) columns that broadcast
        # across lanes.  With j innermost their block index is constant over
        # the inner sweep, so Pallas does not re-DMA them per lane block.
        M, L = N * C, H * W
        x2 = x.reshape(M, L)
        scale_a = jnp.tile(scale_c, N).reshape(M, 1).astype(param_dtype)
        bias_a = jnp.tile(bias_c, N).reshape(M, 1).astype(param_dtype)
        tm, tn = _choose_tiles(M, L, bytes_el, sub, target_block_bytes)
        scale_spec = pl.BlockSpec((tm, 1), lambda i, j: (i, 0))
        bias_spec = pl.BlockSpec((tm, 1), lambda i, j: (i, 0))

    # Grid order: row blocks (i) outer, lane blocks (j) inner — do not reorder.
    grid = (pl.cdiv(M, tm), pl.cdiv(L, tn))

    # Default double-buffered in + out plus small params; clamp the requested
    # limit to the actual chip budget (v7x only has 64 MiB of VMEM).
    block_bytes = tm * tn * bytes_el
    vmem_cap = _vmem_capacity_bytes()
    vmem_limit = int(min(vmem_cap * 3 // 4, max(32 << 20, 8 * block_bytes)))

    out2 = pl.pallas_call(
        _fbn_kernel,
        out_shape=jax.ShapeDtypeStruct((M, L), x2.dtype),
        grid_spec=pltpu.PrefetchScalarGridSpec(
            num_scalar_prefetch=0,
            grid=grid,
            in_specs=[
                pl.BlockSpec((tm, tn), lambda i, j: (i, j)),   # x tile (streams)
                scale_spec,                                    # per-row/col scale
                bias_spec,                                     # per-row/col bias
            ],
            out_specs=pl.BlockSpec((tm, tn), lambda i, j: (i, j)),
        ),
        compiler_params=pltpu.CompilerParams(
            dimension_semantics=("parallel", "parallel"),
            vmem_limit_bytes=vmem_limit),
    )(x2, scale_a, bias_a)

    return out2.reshape(N, C, H, W)


def _reference(x, w, b, rm, rv, eps=1e-5):
    w4 = w.reshape(1, -1, 1, 1)
    b4 = b.reshape(1, -1, 1, 1)
    rv4 = rv.reshape(1, -1, 1, 1)
    rm4 = rm.reshape(1, -1, 1, 1)
    scale = w4 * jax.lax.rsqrt(rv4 + eps)
    bias = b4 - rm4 * scale
    return x * scale + bias


if __name__ == "__main__":
    key = jax.random.PRNGKey(0)
    kx, kw, kb, km, kv = jax.random.split(key, 5)

    N, C, H, W = 2, 4, 16, 16
    x = jax.random.normal(kx, (N, C, H, W), dtype=jnp.float32)

    # Deterministic "frozen" parameters (module init: ones/zeros; perturb so
    # the affine transform is non-trivial).
    weight = jnp.ones((C,), jnp.float32) + 0.1 * jax.random.normal(kw, (C,))
    bias = jnp.zeros((C,), jnp.float32) + 0.1 * jax.random.normal(kb, (C,))
    running_mean = 0.1 * jax.random.normal(km, (C,), dtype=jnp.float32)
    running_var = jnp.ones((C,), jnp.float32) + 0.05 * jnp.abs(
        jax.random.normal(kv, (C,)))

    out = frozen_batchnorm2d(x, weight, bias, running_mean, running_var)
    out = jax.block_until_ready(out)

    ref = _reference(x, weight, bias, running_mean, running_var)
    assert out.shape == (N, C, H, W)
    assert jnp.allclose(out, ref, atol=1e-5, rtol=1e-5), "mismatch vs reference"

    print("KERNEL_OK")
</pallas_src>

<mosaic_0001>
module attributes {stable_mosaic.version = 11 : i64} {
  func.func @_fbn_kernel(%arg0: i32, %arg1: i32, %arg2: memref<2x1024xf32, #tpu.memory_space<vmem>>, %arg3: memref<1x1024xf32, #tpu.memory_space<vmem>>, %arg4: memref<1x1024xf32, #tpu.memory_space<vmem>>, %arg5: memref<2x1024xf32, #tpu.memory_space<vmem>>) attributes {dimension_semantics = [#tpu.dimension_semantics<parallel>, #tpu.dimension_semantics<parallel>], iteration_bounds = array<i64: 1, 1>, scalar_prefetch = 0 : i64, scratch_operands = 0 : i64, tpu.core_type = #tpu.core_type<tc>, window_params = [{transform_indices = @transform_0, window_bounds = array<i64: 2, 1024>}, {transform_indices = @transform_1, window_bounds = array<i64: 1, 1024>}, {transform_indices = @transform_2, window_bounds = array<i64: 1, 1024>}, {transform_indices = @transform_3, window_bounds = array<i64: 2, 1024>}]} {
    %c0 = arith.constant 0 : index
    %c0_0 = arith.constant 0 : index
    %0 = vector.load %arg2[%c0, %c0_0] : memref<2x1024xf32, #tpu.memory_space<vmem>>, vector<2x1024xf32>
    %c0_1 = arith.constant 0 : index
    %c0_2 = arith.constant 0 : index
    %1 = vector.load %arg3[%c0_1, %c0_2] : memref<1x1024xf32, #tpu.memory_space<vmem>>, vector<1x1024xf32>
    %2 = vector.broadcast %1 : vector<1x1024xf32> to vector<2x1024xf32>
    %3 = arith.mulf %0, %2 : vector<2x1024xf32>
    %c0_3 = arith.constant 0 : index
    %c0_4 = arith.constant 0 : index
    %4 = vector.load %arg4[%c0_3, %c0_4] : memref<1x1024xf32, #tpu.memory_space<vmem>>, vector<1x1024xf32>
    %5 = vector.broadcast %4 : vector<1x1024xf32> to vector<2x1024xf32>
    %6 = arith.addf %3, %5 : vector<2x1024xf32>
    %c0_5 = arith.constant 0 : index
    %c0_6 = arith.constant 0 : index
    %7 = vector.load %arg5[%c0_5, %c0_6] : memref<2x1024xf32, #tpu.memory_space<vmem>>, vector<2x1024xf32>
    tpu.vector_store %arg5[%c0_5, %c0_6], %6 {strides = array<i32>} : memref<2x1024xf32, #tpu.memory_space<vmem>>, vector<2x1024xf32>,
    return
  }
  func.func @transform_0(%arg0: i32, %arg1: i32) -> (i32, i32) {
    %c0_i32 = arith.constant 0 : i32
    return %arg0, %arg1 : i32, i32
  }
  func.func @transform_1(%arg0: i32, %arg1: i32) -> (i32, i32) {
    %c0_i32 = arith.constant 0 : i32
    %c0_i32_0 = arith.constant 0 : i32
    return %c0_i32, %arg1 : i32, i32
  }
  func.func @transform_2(%arg0: i32, %arg1: i32) -> (i32, i32) {
    %c0_i32 = arith.constant 0 : i32
    %c0_i32_0 = arith.constant 0 : i32
    return %c0_i32, %arg1 : i32, i32
  }
  func.func @transform_3(%arg0: i32, %arg1: i32) -> (i32, i32) {
    %c0_i32 = arith.constant 0 : i32
    return %arg0, %arg1 : i32, i32
  }
}

</mosaic_0001>

<llo_original>
// kernel: tpu_custom_call.1
$region0: #{tpu_custom_call.1}
  #allocation0 [shape = 'u32[]', space=smem, size = 0x4, offset = 0x4, fixed_abs, tag = 'smem constant byte address 0x4 - core index']
  #allocation1 [shape = 'u32[144,128]{1,0:T(1,128)}', space=vmem, size = 0x12000, scoped, tag = 'internal scratch']
  %s0 = inlined_call_operand.hbm [shape: f32[2,1024], index: 0, kind: input, shape index: {}]
  %s1 = inlined_call_operand.hbm [shape: f32[1,1024], index: 1, kind: input, shape index: {}]
  %s2 = inlined_call_operand.hbm [shape: f32[1,1024], index: 2, kind: input, shape index: {}]
  %s3 = inlined_call_operand.hbm [shape: f32[2,1024], index: 3, kind: output, shape index: {}]
  %s4 = sld [smem:[#allocation0]]
  $region34: #{tpu_custom_call.1} parent=0
    _
  %s6 = ssub.s32 1, %s4
  %s7 = scalar_select 0, %s6, %s4
  $region1: #{tpu_custom_call.1} parent=0
    #allocation2 [shape = 'u8[8192]{0}', space=vmem, size = 0x2000, scoped, tag = 'input window, operand 0, single buffered']
    #allocation3 [shape = 's32[1]{0}', space=sflag, size = 0x4, scoped, tag = 'scoped memory for tpu_custom_call.1']
    #allocation4 [shape = 's32[1]{0}', space=sflag, size = 0x4, scoped, tag = 'scoped memory for tpu_custom_call.1']
    #allocation5 [shape = 'u8[4096]{0}', space=vmem, size = 0x1000, scoped, tag = 'input window, operand 1, single buffered']
    #allocation6 [shape = 's32[1]{0}', space=sflag, size = 0x4, scoped, tag = 'scoped memory for tpu_custom_call.1']
    #allocation7 [shape = 'u8[4096]{0}', space=vmem, size = 0x1000, scoped, tag = 'input window, operand 2, single buffered']
    #allocation8 [shape = 'u8[8192]{0}', space=vmem, size = 0x2000, scoped, tag = 'output window, operand 0, single buffered']
    %8 = vsyncpa [#allocation3], 0
    %9 = vsyncpa [#allocation6], 0
    %10 = vsyncpa [#allocation4], 0
    // Predicated region
    $region2: #{tpu_custom_call.1} parent=1 // pred_check
      _
    $region3: #{tpu_custom_call.1} parent=1 // pred_check_branch
      %12 = sbr.rel (0) target = $region5
    $region4: #{tpu_custom_call.1} parent=1 // pred_region
      %s14 = ssub.s32 256, 256
      %15 = vsyncadd [#allocation3], %s14
      %s17 = sshll.u32 [#allocation2], 4
      %s18 = int_to_ptr.vmem [resolvable:$true] %s17
      %20 = dma.hbm_to_vmem [thread:$0]  %s0, 256, %s18, [#allocation3]
    $region5: #{tpu_custom_call.1} parent=1 // pred_fallthru
      _
    // Predicated region
    $region6: #{tpu_custom_call.1} parent=1 // pred_check
      _
    $region7: #{tpu_custom_call.1} parent=1 // pred_check_branch
      %22 = sbr.rel (0) target = $region9
    $region8: #{tpu_custom_call.1} parent=1 // pred_region
      %s24 = ssub.s32 128, 128
      %25 = vsyncadd [#allocation6], %s24
      %s27 = sshll.u32 [#allocation5], 4
      %s28 = int_to_ptr.vmem [resolvable:$true] %s27
      %30 = dma.hbm_to_vmem [thread:$0]  %s1, 128, %s28, [#allocation6]
    $region9: #{tpu_custom_call.1} parent=1 // pred_fallthru
      _
    // Predicated region
    $region10: #{tpu_custom_call.1} parent=1 // pred_check
      _
    $region11: #{tpu_custom_call.1} parent=1 // pred_check_branch
      %32 = sbr.rel (0) target = $region13
    $region12: #{tpu_custom_call.1} parent=1 // pred_region
      %s34 = ssub.s32 128, 128
      %35 = vsyncadd [#allocation6], %s34
      %s37 = sshll.u32 [#allocation7], 4
      %s38 = int_to_ptr.vmem [resolvable:$true] %s37
      %40 = dma.hbm_to_vmem [thread:$0]  %s2, 128, %s38, [#allocation6]
    $region13: #{tpu_custom_call.1} parent=1 // pred_fallthru
      _
    // Predicated region
    $region14: #{tpu_custom_call.1} parent=1 // pred_check
      _
    $region15: #{tpu_custom_call.1} parent=1 // pred_check_branch
      %42 = sbr.rel (0) target = $region17
    $region16: #{tpu_custom_call.1} parent=1 // pred_region
      %43 = dma.done [#allocation3], 256
    $region17: #{tpu_custom_call.1} parent=1 // pred_fallthru
      _
    // Predicated region
    $region18: #{tpu_custom_call.1} parent=1 // pred_check
      _
    $region19: #{tpu_custom_call.1} parent=1 // pred_check_branch
      %45 = sbr.rel (0) target = $region21
    $region20: #{tpu_custom_call.1} parent=1 // pred_region
      %46 = dma.done [#allocation6], 128
    $region21: #{tpu_custom_call.1} parent=1 // pred_fallthru
      _
    // Predicated region
    $region22: #{tpu_custom_call.1} parent=1 // pred_check
      _
    $region23: #{tpu_custom_call.1} parent=1 // pred_check_branch
      %48 = sbr.rel (0) target = $region25
    $region24: #{tpu_custom_call.1} parent=1 // pred_region
      %49 = dma.done [#allocation6], 128
    $region25: #{tpu_custom_call.1} parent=1 // pred_fallthru
      _
    %v50 = vld [vmem:[#allocation2] sm:$0xff]
    %v51 = vld [vmem:[#allocation2 + $0x8] sm:$0xff]
    %v52 = vld [vmem:[#allocation5] sm:$0xff]
    %v54 = vlaneseq
    %v55 = vshrl.u32 %v54, 7
    %v56 = vsub.s32 0, %v55
    %v57 = vrot.slane %v52, %v56
    %v58 = vlaneseq
    %v59 = vshrl.u32 %v58, 7
    %v60 = vsub.s32 1, %v59
    %v61 = vrot.slane %v52, %v60
    %v62 = vlaneseq
    %v63 = vshrl.u32 %v62, 7
    %v64 = vsub.s32 2, %v63
    %v65 = vrot.slane %v52, %v64
    %v66 = vlaneseq
    %v67 = vshrl.u32 %v66, 7
    %v68 = vsub.s32 3, %v67
    %v69 = vrot.slane %v52, %v68
    %v70 = vlaneseq
    %v71 = vshrl.u32 %v70, 7
    %v72 = vsub.s32 4, %v71
    %v73 = vrot.slane %v52, %v72
    %v74 = vlaneseq
    %v75 = vshrl.u32 %v74, 7
    %v76 = vsub.s32 5, %v75
    %v77 = vrot.slane %v52, %v76
    %v78 = vlaneseq
    %v79 = vshrl.u32 %v78, 7
    %v80 = vsub.s32 6, %v79
    %v81 = vrot.slane %v52, %v80
    %v82 = vlaneseq
    %v83 = vshrl.u32 %v82, 7
    %v84 = vsub.s32 7, %v83
    %v85 = vrot.slane %v52, %v84
    %v86 = vcombine.low %v57, %v61
    %v87 = vcombine.low %v65, %v69
    %v89 = vunpack.c.l.s4 1983009808
    %v90 = vunpack.c.0.s8 %v89
    %v91 = vlaneseq
    %v92 = vshrl.u32 %v91, 7
    %v93 = vsub.s32 %v90, %v92
    %v94 = vrot.slane %v86, %v93
    %v96 = vunpack.c.l.s4 1983009808
    %v97 = vunpack.c.0.s8 %v96
    %v98 = vlaneseq
    %v99 = vshrl.u32 %v98, 7
    %v100 = vsub.s32 %v97, %v99
    %v101 = vrot.slane %v87, %v100
    %v102 = vcombine.low %v94, %v101
    %v103 = vcombine.low %v73, %v77
    %v104 = vcombine.low %v81, %v85
    %v106 = vunpack.c.l.s4 1983009808
    %v107 = vunpack.c.0.s8 %v106
    %v108 = vlaneseq
    %v109 = vshrl.u32 %v108, 7
    %v110 = vsub.s32 %v107, %v109
    %v111 = vrot.slane %v103, %v110
    %v113 = vunpack.c.l.s4 1983009808
    %v114 = vunpack.c.0.s8 %v113
    %v115 = vlaneseq
    %v116 = vshrl.u32 %v115, 7
    %v117 = vsub.s32 %v114, %v116
    %v118 = vrot.slane %v104, %v117
    %v119 = vcombine.low %v111, %v118
    %v122 = vmul.f32 %v50, %v102
    %v123 = vmul.f32 %v51, %v119
    %v124 = vld [vmem:[#allocation7] sm:$0xff]
    %v126 = vlaneseq
    %v127 = vshrl.u32 %v126, 7
    %v128 = vsub.s32 0, %v127
    %v129 = vrot.slane %v124, %v128
    %v130 = vlaneseq
    %v131 = vshrl.u32 %v130, 7
    %v132 = vsub.s32 1, %v131
    %v133 = vrot.slane %v124, %v132
    %v134 = vlaneseq
    %v135 = vshrl.u32 %v134, 7
    %v136 = vsub.s32 2, %v135
    %v137 = vrot.slane %v124, %v136
    %v138 = vlaneseq
    %v139 = vshrl.u32 %v138, 7
    %v140 = vsub.s32 3, %v139
    %v141 = vrot.slane %v124, %v140
    %v142 = vlaneseq
    %v143 = vshrl.u32 %v142, 7
    %v144 = vsub.s32 4, %v143
    %v145 = vrot.slane %v124, %v144
    %v146 = vlaneseq
    %v147 = vshrl.u32 %v146, 7
    %v148 = vsub.s32 5, %v147
    %v149 = vrot.slane %v124, %v148
    %v150 = vlaneseq
    %v151 = vshrl.u32 %v150, 7
    %v152 = vsub.s32 6, %v151
    %v153 = vrot.slane %v124, %v152
    %v154 = vlaneseq
    %v155 = vshrl.u32 %v154, 7
    %v156 = vsub.s32 7, %v155
    %v157 = vrot.slane %v124, %v156
    %v158 = vcombine.low %v129, %v133
    %v159 = vcombine.low %v137, %v141
    %v161 = vunpack.c.l.s4 1983009808
    %v162 = vunpack.c.0.s8 %v161
    %v163 = vlaneseq
    %v164 = vshrl.u32 %v163, 7
    %v165 = vsub.s32 %v162, %v164
    %v166 = vrot.slane %v158, %v165
    %v168 = vunpack.c.l.s4 1983009808
    %v169 = vunpack.c.0.s8 %v168
    %v170 = vlaneseq
    %v171 = vshrl.u32 %v170, 7
    %v172 = vsub.s32 %v169, %v171
    %v173 = vrot.slane %v159, %v172
    %v174 = vcombine.low %v166, %v173
    %v175 = vcombine.low %v145, %v149
    %v176 = vcombine.low %v153, %v157
    %v178 = vunpack.c.l.s4 1983009808
    %v179 = vunpack.c.0.s8 %v178
    %v180 = vlaneseq
    %v181 = vshrl.u32 %v180, 7
    %v182 = vsub.s32 %v179, %v181
    %v183 = vrot.slane %v175, %v182
    %v185 = vunpack.c.l.s4 1983009808
    %v186 = vunpack.c.0.s8 %v185
    %v187 = vlaneseq
    %v188 = vshrl.u32 %v187, 7
    %v189 = vsub.s32 %v186, %v188
    %v190 = vrot.slane %v176, %v189
    %v191 = vcombine.low %v183, %v190
    %v194 = vadd.f32 %v122, %v174
    %v195 = vadd.f32 %v123, %v191
    %196 = vst [vmem:[#allocation8] sm:$0xff] %v194
    %197 = vst [vmem:[#allocation8 + $0x8] sm:$0xff] %v195
    // Predicated region
    $region26: #{tpu_custom_call.1} parent=1 // pred_check
      _
    $region27: #{tpu_custom_call.1} parent=1 // pred_check_branch
      %199 = sbr.rel (0) target = $region29
    $region28: #{tpu_custom_call.1} parent=1 // pred_region
      %s201 = ssub.s32 256, 256
      %202 = vsyncadd [#allocation4], %s201
      %s204 = sshll.u32 [#allocation8], 4
      %s205 = int_to_ptr.vmem [resolvable:$true] %s204
      %207 = dma.vmem_to_hbm [thread:$0]  %s205, 256, %s3, [#allocation4]
    $region29: #{tpu_custom_call.1} parent=1 // pred_fallthru
      _
    // Predicated region
    $region30: #{tpu_custom_call.1} parent=1 // pred_check
      _
    $region31: #{tpu_custom_call.1} parent=1 // pred_check_branch
      %209 = sbr.rel (0) target = $region33
    $region32: #{tpu_custom_call.1} parent=1 // pred_region
      %210 = dma.done [#allocation4], 256
    $region33: #{tpu_custom_call.1} parent=1 // pred_fallthru
      _
    %211 = vsyncpa [#allocation3], 1
    %212 = vsyncpa [#allocation6], 1
    %213 = vsyncpa [#allocation4], 1

</llo_original>
